<compile_context>
chip_gen: v6e
topology: v6e:2x2x1
jax: 0.10.0
libtpu: 0.0.40
codegen_flags: <defaults>
</compile_context>

<pallas_src>
import jax
import jax.numpy as jnp
from jax.experimental import pallas as pl
from jax.experimental.pallas import tpu as pltpu


def _round_up(x, m):
    return ((x + m - 1) // m) * m


def _choose_batch_tile(B, batch_tile):
    """Sublane-aligned batch tile: multiple of 8, minimal padding, >=2 grid steps if possible."""
    B8 = _round_up(max(B, 1), 8)
    cap = max(8, min(_round_up(batch_tile, 8), B8))
    # v7x has 2 TensorCores; keep at least 2 "parallel" grid steps when there is enough work.
    if B8 >= 16:
        cap = min(cap, _round_up((B8 + 1) // 2, 8))
    best_tb, best_key = 8, None
    for tb in range(8, cap + 1, 8):
        pad = _round_up(B8, tb) - B8
        key = (pad, -tb)  # minimize padded rows, tie-break: larger tile
        if best_key is None or key < best_key:
            best_key, best_tb = key, tb
    return best_tb


def _clip_classifier_kernel(pooled_ref, w_fold_ref, w_head_ref, b_head_ref, out_ref):
    # pooled_ref : (TB, Dp) bf16  spatially mean-pooled image pixels (== mean over patches)
    # w_fold_ref : (Dp, E)  bf16  folded (patch-embed @ visual-projection) weight
    # w_head_ref : (E, Kp)  f32   head weight, zero-padded to Kp = 128*k lanes
    # b_head_ref : (1, Kp)  f32   head bias, zero-padded
    # out_ref    : (TB, Kp) f32   logits (lane-dense; sliced back to K in the wrapper)

    # --- clip_base (folded): one (TB, Dp) x (Dp, E) MXU matmul, f32 accumulation ---
    feat = jnp.dot(pooled_ref[...], w_fold_ref[...],
                   preferred_element_type=jnp.float32)                       # (TB, E)

    # --- classification_head: L2-normalize + linear head, all f32 (head GEMM is tiny) ---
    # NOTE: keep eps > 0 — zero-padded batch rows would otherwise produce NaN in-kernel.
    inv_norm = jax.lax.rsqrt(jnp.sum(feat * feat, axis=-1, keepdims=True) + 1e-12)
    feat_n = feat * inv_norm                                                  # (TB, E)
    logits = jnp.dot(feat_n, w_head_ref[...],
                     preferred_element_type=jnp.float32) + b_head_ref[...]    # (TB, Kp)
    out_ref[...] = logits


def clip_classifier_forward(images, params, patch_size, *, batch_tile=128):
    """images: (B, C, H, W) float NCHW. Returns logits (B, num_classes), float32."""
    B, C, H, W = images.shape
    P = patch_size
    gh, gw = H // P, W // P
    Dp = C * P * P

    w_embed, w_proj, w_head, b_head = params
    E = w_proj.shape[1]
    K = w_head.shape[1]

    # Linearity folding (exact): mean over patches of the flattened patches equals a spatial
    # mean of the image at fixed intra-patch offsets, with the same (c, ph, pw) ordering as
    # the patch-embed input.  Single streaming read of the image data; no (B, Np, Dp) array.
    pooled = images.astype(jnp.float32).reshape(B, C, gh, P, gw, P).mean(axis=(2, 4))
    pooled = pooled.reshape(B, Dp)

    # Fold the two linear maps of clip_base once in f32, then cast for the MXU.
    w_fold = (w_embed.astype(jnp.float32) @ w_proj.astype(jnp.float32)).astype(jnp.bfloat16)

    # Batch tiling (sublane-aligned, minimal padding, v7x dual-TC aware) and lane-dense classes.
    TB = _choose_batch_tile(B, batch_tile)
    B_pad = _round_up(B, TB)
    K_pad = _round_up(K, 128)

    pooled_bf16 = pooled.astype(jnp.bfloat16)
    if B_pad != B:
        pooled_bf16 = jnp.pad(pooled_bf16, ((0, B_pad - B), (0, 0)))
    w_head_p = jnp.zeros((E, K_pad), jnp.float32).at[:, :K].set(w_head.astype(jnp.float32))
    b_head_p = jnp.zeros((1, K_pad), jnp.float32).at[0, :K].set(b_head.astype(jnp.float32))

    # Concrete VMEM budget: double-buffered pooled/logits tiles + resident weights + f32
    # temporaries, with generous slack; capped below v7x's 64 MiB physical VMEM, and at real
    # CLIP shapes (Dp=768, E=768, K_pad=1024, TB=128) this lands around ~30 MiB.
    window_bytes = (TB * Dp * 2            # pooled tile (bf16)
                    + Dp * E * 2           # folded weight (bf16)
                    + E * K_pad * 4        # head weight (f32)
                    + K_pad * 4            # head bias (f32)
                    + TB * K_pad * 4)      # logits tile (f32)
    vmem_limit = int(min(48 << 20, max(8 << 20, 8 * window_bytes)))

    out = pl.pallas_call(
        _clip_classifier_kernel,
        out_shape=jax.ShapeDtypeStruct((B_pad, K_pad), jnp.float32),
        grid_spec=pltpu.PrefetchScalarGridSpec(
            num_scalar_prefetch=0,
            grid=(B_pad // TB,),
            in_specs=[
                pl.BlockSpec((TB, Dp), lambda b: (b, 0)),      # pooled: tiled over batch
                pl.BlockSpec((Dp, E), lambda b: (0, 0)),       # folded weight: resident
                pl.BlockSpec((E, K_pad), lambda b: (0, 0)),    # head weight: resident
                pl.BlockSpec((1, K_pad), lambda b: (0, 0)),    # head bias:   resident
            ],
            out_specs=pl.BlockSpec((TB, K_pad), lambda b: (b, 0)),  # lane-dense logits tile
        ),
        compiler_params=pltpu.CompilerParams(
            dimension_semantics=("parallel",),                 # megacore-shard the batch axis
            vmem_limit_bytes=vmem_limit,
        ),
    )(pooled_bf16, w_fold, w_head_p, b_head_p)
    return out[:B, :K]


def _reference_forward(images, params, patch_size):
    # Pure-JAX f32 reference of the module semantics (embed -> mean-pool -> project -> norm -> head).
    B, C, H, W = images.shape
    P = patch_size
    gh, gw = H // P, W // P
    patches = images.reshape(B, C, gh, P, gw, P).transpose(0, 2, 4, 1, 3, 5)
    patches = patches.reshape(B, gh * gw, C * P * P).astype(jnp.float32)
    w_embed, w_proj, w_head, b_head = params
    emb = patches @ w_embed.astype(jnp.float32)
    pooled = emb.mean(axis=1)
    feat = pooled @ w_proj.astype(jnp.float32)
    feat = feat / jnp.sqrt(jnp.sum(feat * feat, axis=-1, keepdims=True) + 1e-12)
    return feat @ w_head.astype(jnp.float32) + b_head[None, :].astype(jnp.float32)


if __name__ == "__main__":
    # Small shapes consistent with the forward: batch=2, channels=4, spatial=16.
    B, C, H, W = 2, 4, 16, 16
    P = 4                 # patch size
    D = 32                # patch embedding width
    E = 32                # CLIP visual projection (feature) dim
    K = 8                 # num classes
    Dp = C * P * P        # 64

    key = jax.random.PRNGKey(0)
    k_img, k_we, k_wp, k_wh, k_bh = jax.random.split(key, 5)
    images = jax.random.normal(k_img, (B, C, H, W), dtype=jnp.float32)
    params = (
        0.05 * jax.random.normal(k_we, (Dp, D), dtype=jnp.float32),   # patch embed
        0.05 * jax.random.normal(k_wp, (D, E), dtype=jnp.float32),    # visual projection
        0.05 * jax.random.normal(k_wh, (E, K), dtype=jnp.float32),    # head weight
        0.01 * jax.random.normal(k_bh, (K,), dtype=jnp.float32),      # head bias
    )

    logits = jax.block_until_ready(clip_classifier_forward(images, params, P))
    ref = jax.block_until_ready(_reference_forward(images, params, P))
    assert logits.shape == (B, K)
    # Kernel uses bf16 MXU operands (pooled + folded weight) with f32 accumulation -> compare
    # vs the f32 reference with a tolerance that covers bf16 input rounding.
    assert jnp.allclose(logits, ref, atol=2e-2, rtol=2e-2), "mismatch vs reference"
    print("KERNEL_OK")
</pallas_src>

<mosaic_0001>
module attributes {stable_mosaic.version = 11 : i64} {
  func.func @_clip_classifier_kernel(%arg0: i32, %arg1: memref<8x64xbf16, #tpu.memory_space<vmem>>, %arg2: memref<64x32xbf16, #tpu.memory_space<vmem>>, %arg3: memref<32x128xf32, #tpu.memory_space<vmem>>, %arg4: memref<1x128xf32, #tpu.memory_space<vmem>>, %arg5: memref<8x128xf32, #tpu.memory_space<vmem>>) attributes {dimension_semantics = [#tpu.dimension_semantics<parallel>], iteration_bounds = array<i64: 1>, scalar_prefetch = 0 : i64, scratch_operands = 0 : i64, tpu.core_type = #tpu.core_type<tc>, window_params = [{transform_indices = @transform_0, window_bounds = array<i64: 8, 64>}, {pipeline_mode = #tpu.pipeline_mode<synchronous>, transform_indices = @transform_1, window_bounds = array<i64: 64, 32>}, {pipeline_mode = #tpu.pipeline_mode<synchronous>, transform_indices = @transform_2, window_bounds = array<i64: 32, 128>}, {pipeline_mode = #tpu.pipeline_mode<synchronous>, transform_indices = @transform_3, window_bounds = array<i64: 1, 128>}, {transform_indices = @transform_4, window_bounds = array<i64: 8, 128>}]} {
    %c0 = arith.constant 0 : index
    %c0_0 = arith.constant 0 : index
    %0 = vector.load %arg1[%c0, %c0_0] : memref<8x64xbf16, #tpu.memory_space<vmem>>, vector<8x64xbf16>
    %c0_1 = arith.constant 0 : index
    %c0_2 = arith.constant 0 : index
    %1 = vector.load %arg2[%c0_1, %c0_2] : memref<64x32xbf16, #tpu.memory_space<vmem>>, vector<64x32xbf16>
    %cst = arith.constant dense<0.000000e+00> : vector<8x32xf32>
    %2 = tpu.matmul %0, %1, %cst {dimension_numbers = #tpu.dot_dimension_numbers<[1], [0], [0], [1], [0, 0, 1, 1], [], []>} : vector<8x64xbf16>, vector<64x32xbf16>, vector<8x32xf32> -> vector<8x32xf32>
    %3 = arith.mulf %2, %2 : vector<8x32xf32>
    %cst_3 = arith.constant dense<0.000000e+00> : vector<8xf32>
    %4 = vector.multi_reduction <add>, %3, %cst_3 [1] : vector<8x32xf32> to vector<8xf32>
    %5 = vector.shape_cast %4 : vector<8xf32> to vector<8x1xf32>
    %cst_4 = arith.constant 9.99999996E-13 : f32
    %6 = vector.broadcast %cst_4 : f32 to vector<8x1xf32>
    %7 = arith.addf %5, %6 : vector<8x1xf32>
    %8 = math.rsqrt %7 : vector<8x1xf32>
    %9 = vector.broadcast %8 : vector<8x1xf32> to vector<8x32xf32>
    %10 = arith.mulf %2, %9 : vector<8x32xf32>
    %c0_5 = arith.constant 0 : index
    %c0_6 = arith.constant 0 : index
    %11 = vector.load %arg3[%c0_5, %c0_6] : memref<32x128xf32, #tpu.memory_space<vmem>>, vector<32x128xf32>
    %cst_7 = arith.constant dense<0.000000e+00> : vector<8x128xf32>
    %12 = tpu.matmul %10, %11, %cst_7 {dimension_numbers = #tpu.dot_dimension_numbers<[1], [0], [0], [1], [0, 0, 1, 1], [], []>} : vector<8x32xf32>, vector<32x128xf32>, vector<8x128xf32> -> vector<8x128xf32>
    %c0_8 = arith.constant 0 : index
    %c0_9 = arith.constant 0 : index
    %13 = vector.load %arg4[%c0_8, %c0_9] : memref<1x128xf32, #tpu.memory_space<vmem>>, vector<1x128xf32>
    %14 = vector.broadcast %13 : vector<1x128xf32> to vector<8x128xf32>
    %15 = arith.addf %12, %14 : vector<8x128xf32>
    %c0_10 = arith.constant 0 : index
    %c0_11 = arith.constant 0 : index
    %16 = vector.load %arg5[%c0_10, %c0_11] : memref<8x128xf32, #tpu.memory_space<vmem>>, vector<8x128xf32>
    tpu.vector_store %arg5[%c0_10, %c0_11], %15 {strides = array<i32>} : memref<8x128xf32, #tpu.memory_space<vmem>>, vector<8x128xf32>,
    return
  }
  func.func @transform_0(%arg0: i32) -> (i32, i32) {
    %c0_i32 = arith.constant 0 : i32
    %c0_i32_0 = arith.constant 0 : i32
    return %arg0, %c0_i32 : i32, i32
  }
  func.func @transform_1(%arg0: i32) -> (i32, i32) {
    %c0_i32 = arith.constant 0 : i32
    %c0_i32_0 = arith.constant 0 : i32
    %c0_i32_1 = arith.constant 0 : i32
    return %c0_i32, %c0_i32_0 : i32, i32
  }
  func.func @transform_2(%arg0: i32) -> (i32, i32) {
    %c0_i32 = arith.constant 0 : i32
    %c0_i32_0 = arith.constant 0 : i32
    %c0_i32_1 = arith.constant 0 : i32
    return %c0_i32, %c0_i32_0 : i32, i32
  }
  func.func @transform_3(%arg0: i32) -> (i32, i32) {
    %c0_i32 = arith.constant 0 : i32
    %c0_i32_0 = arith.constant 0 : i32
    %c0_i32_1 = arith.constant 0 : i32
    return %c0_i32, %c0_i32_0 : i32, i32
  }
  func.func @transform_4(%arg0: i32) -> (i32, i32) {
    %c0_i32 = arith.constant 0 : i32
    %c0_i32_0 = arith.constant 0 : i32
    return %arg0, %c0_i32 : i32, i32
  }
}

</mosaic_0001>

<llo_original>
// kernel: tpu_custom_call.1
$region0: #{tpu_custom_call.1}
  #allocation0 [shape = 'u32[]', space=smem, size = 0x4, offset = 0x4, fixed_abs, tag = 'smem constant byte address 0x4 - core index']
  #allocation1 [shape = 'u32[144,128]{1,0:T(1,128)}', space=vmem, size = 0x12000, scoped, tag = 'internal scratch']
  %s0 = inlined_call_operand.vmem [shape: bf16[8,64], index: 0, kind: input, shape index: {}]
  %s1 = inlined_call_operand.vmem [shape: bf16[64,32], index: 1, kind: input, shape index: {}]
  %s2 = inlined_call_operand.vmem [shape: f32[32,128], index: 2, kind: input, shape index: {}]
  %s3 = inlined_call_operand.vmem [shape: f32[1,128], index: 3, kind: input, shape index: {}]
  %s4 = inlined_call_operand.hbm [shape: f32[8,128], index: 4, kind: output, shape index: {}]
  %s5 = sld [smem:[#allocation0]]
  $region26: #{tpu_custom_call.1} parent=0
    _
  %s7 = ssub.s32 1, %s5
  %s8 = scalar_select 0, %s7, %s5
  $region1: #{tpu_custom_call.1} parent=0
    #allocation2 [shape = 'u8[4096]{0}', space=vmem, size = 0x1000, scoped, tag = 'output window, operand 0, single buffered']
    #allocation3 [shape = 's32[1]{0}', space=sflag, size = 0x4, scoped, tag = 'scoped memory for tpu_custom_call.1']
    %9 = vsyncpa [#allocation3], 0
    // Predicated region
    $region2: #{tpu_custom_call.1} parent=1 // pred_check
      _
    $region3: #{tpu_custom_call.1} parent=1 // pred_check_branch
      %11 = sbr.rel (0) target = $region5
    $region4: #{tpu_custom_call.1} parent=1 // pred_region
      _
    $region5: #{tpu_custom_call.1} parent=1 // pred_fallthru
      _
    // Predicated region
    $region6: #{tpu_custom_call.1} parent=1 // pred_check
      _
    $region7: #{tpu_custom_call.1} parent=1 // pred_check_branch
      %13 = sbr.rel (0) target = $region9
    $region8: #{tpu_custom_call.1} parent=1 // pred_region
      _
    $region9: #{tpu_custom_call.1} parent=1 // pred_fallthru
      _
    // Predicated region
    $region10: #{tpu_custom_call.1} parent=1 // pred_check
      _
    $region11: #{tpu_custom_call.1} parent=1 // pred_check_branch
      %15 = sbr.rel (0) target = $region13
    $region12: #{tpu_custom_call.1} parent=1 // pred_region
      _
    $region13: #{tpu_custom_call.1} parent=1 // pred_fallthru
      _
    // Predicated region
    $region14: #{tpu_custom_call.1} parent=1 // pred_check
      _
    $region15: #{tpu_custom_call.1} parent=1 // pred_check_branch
      %17 = sbr.rel (0) target = $region17
    $region16: #{tpu_custom_call.1} parent=1 // pred_region
      _
    $region17: #{tpu_custom_call.1} parent=1 // pred_fallthru
      _
    %v19 = vld [vmem:[%s0] sm:$0xf]
    %v20 = vld [vmem:[%s1] sm:$0xf]
    %v21 = vld [vmem:[%s1 + $0x4] sm:$0xf]
    %v22 = vld [vmem:[%s1 + $0x8] sm:$0xf]
    %v23 = vld [vmem:[%s1 + $0xc] sm:$0xf]
    %v24 = vld [vmem:[%s1 + $0x10] sm:$0xf]
    %v25 = vld [vmem:[%s1 + $0x14] sm:$0xf]
    %v26 = vld [vmem:[%s1 + $0x18] sm:$0xf]
    %v27 = vld [vmem:[%s1 + $0x1c] sm:$0xf]
    %v36 = vunpack.c.l.b16 %v20
    %v37 = vunpack.c.l.b16 %v21
    %v38 = vunpack.c.l.b16 %v22
    %v39 = vunpack.c.l.b16 %v23
    %v40 = vunpack.c.l.b16 %v24
    %v41 = vunpack.c.l.b16 %v25
    %v42 = vunpack.c.l.b16 %v26
    %v43 = vunpack.c.l.b16 %v27
    %v44 = vpack.c.b16 %v37, %v36
    %v45 = vpack.c.b16 %v39, %v38
    %v46 = vpack.c.b16 %v41, %v40
    %v47 = vpack.c.b16 %v43, %v42
    %vm52 = vcmask 523264
    %v54 = vsel %vm52, %v19, 0
    %56 = vmatprep.subr.bf16.mxu0 0
    %57 = vmatpush1.bf16.msra.mxu0 0
    %58 = vmatprep.subr.bf16.mxu0 0
    %59 = vmatpush1.bf16.msra.mxu0 0
    %60 = vmatprep.subr.bf16.mxu0 0
    %61 = vmatpush1.bf16.msra.mxu0 0
    %62 = vmatprep.subr.bf16.mxu0 0
    %63 = vmatpush1.bf16.msra.mxu0 0
    %64 = vmatprep.subr.bf16.mxu0 0
    %65 = vmatpush1.bf16.msra.mxu0 %v47
    %66 = vmatprep.subr.bf16.mxu0 0
    %67 = vmatpush1.bf16.msra.mxu0 %v46
    %68 = vmatprep.subr.bf16.mxu0 0
    %69 = vmatpush1.bf16.msra.mxu0 %v45
    %70 = vmatprep.subr.bf16.mxu0 0
    %71 = vmatpush1.bf16.msra.mxu0 %v44
    %72 = vmatprep.subr.bf16.mxu0 0
    %73 = vmatpush2.bf16.msra.mxu0 0
    %74 = vmatprep.subr.bf16.mxu0 0
    %75 = vmatpush2.bf16.msra.mxu0 0
    %76 = vmatprep.subr.bf16.mxu0 0
    %77 = vmatpush2.bf16.msra.mxu0 0
    %78 = vmatprep.subr.bf16.mxu0 0
    %79 = vmatpush2.bf16.msra.mxu0 0
    %80 = vmatprep.subr.bf16.mxu0 0
    %81 = vmatpush2.bf16.msra.mxu0 0
    %82 = vmatprep.subr.bf16.mxu0 0
    %83 = vmatpush2.bf16.msra.mxu0 0
    %84 = vmatprep.subr.bf16.mxu0 0
    %85 = vmatpush2.bf16.msra.mxu0 0
    %86 = vmatprep.subr.bf16.mxu0 0
    %87 = vmatpush2.bf16.msra.mxu0 0
    %88 = vmatprep.mubr.bf16.mxu0 0
    %89 = vmatmul.mubr.bf16.gmra.mxu0 %v54
    %v90 = vpop.f32.mrf.mxu0
    %v91 = vadd.f32 0.0, %v90
    %v92 = vpop.f32.mrf.mxu0
    %v93 = vpop.f32.mrf.mxu0
    %v94 = vpop.f32.mrf.mxu0
    %95 = vdwg.mxu0
    %v96 = vmul.f32 %v91, %v91
    %vm97 = vcmask 261120
    %v98 = vsel %vm97, %v96, 0.0
    %99 = vadd.xlane.f32.xlu0 %v98
    %v100 = vpop.xlane.xlu0 %99
    %v101 = vadd.f32 %v100, 1e-12
    %v102 = vrsqrt.pop %v101
    %v103 = vmul.f32 %v91, %v102
    %v104 = vld [vmem:[%s2] sm:$0xff]
    %v105 = vld [vmem:[%s2 + $0x8] sm:$0xff]
    %v106 = vld [vmem:[%s2 + $0x10] sm:$0xff]
    %v107 = vld [vmem:[%s2 + $0x18] sm:$0xff]
    %v108 = vld [vmem:[%s3] sm:$0x1]
    %v110 = vlaneseq
    %v111 = vshrl.u32 %v110, 7
    %v112 = vsub.s32 0, %v111
    %v113 = vrot.slane %v108, %v112
    %v116 = vsel %vm97, %v103, 0
    %118 = vmatprep.subr.mxu0 0.0
    %119 = vmatpush1.msra.mxu0 0.0
    %120 = vmatprep.subr.mxu0 0.0
    %121 = vmatpush1.msra.mxu0 0.0
    %122 = vmatprep.subr.mxu0 0.0
    %123 = vmatpush1.msra.mxu0 0.0
    %124 = vmatprep.subr.mxu0 0.0
    %125 = vmatpush1.msra.mxu0 0.0
    %126 = vmatprep.subr.mxu0 0.0
    %127 = vmatpush1.msra.mxu0 0.0
    %128 = vmatprep.subr.mxu0 0.0
    %129 = vmatpush1.msra.mxu0 0.0
    %130 = vmatprep.subr.mxu0 0.0
    %131 = vmatpush1.msra.mxu0 0.0
    %132 = vmatprep.subr.mxu0 0.0
    %133 = vmatpush1.msra.mxu0 0.0
    %134 = vmatprep.subr.mxu0 0.0
    %135 = vmatpush1.msra.mxu0 0.0
    %136 = vmatprep.subr.mxu0 0.0
    %137 = vmatpush1.msra.mxu0 0.0
    %138 = vmatprep.subr.mxu0 0.0
    %139 = vmatpush1.msra.mxu0 0.0
    %140 = vmatprep.subr.mxu0 0.0
    %141 = vmatpush1.msra.mxu0 0.0
    %142 = vmatprep.subr.mxu0 0.0
    %143 = vmatpush1.msra.mxu0 %v107
    %144 = vmatprep.subr.mxu0 0.0
    %145 = vmatpush1.msra.mxu0 %v106
    %146 = vmatprep.subr.mxu0 0.0
    %147 = vmatpush1.msra.mxu0 %v105
    %148 = vmatprep.subr.mxu0 0.0
    %149 = vmatpush1.msra.mxu0 %v104
    %150 = vmatprep.subr.mxu0 0.0
    %151 = vmatpush2.msra.mxu0 0.0
    %152 = vmatprep.subr.mxu0 0.0
    %153 = vmatpush2.msra.mxu0 0.0
    %154 = vmatprep.subr.mxu0 0.0
    %155 = vmatpush2.msra.mxu0 0.0
    %156 = vmatprep.subr.mxu0 0.0
    %157 = vmatpush2.msra.mxu0 0.0
    %158 = vmatprep.subr.mxu0 0.0
    %159 = vmatpush2.msra.mxu0 0.0
    %160 = vmatprep.subr.mxu0 0.0
    %161 = vmatpush2.msra.mxu0 0.0
    %162 = vmatprep.subr.mxu0 0.0
    %163 = vmatpush2.msra.mxu0 0.0
    %164 = vmatprep.subr.mxu0 0.0
    %165 = vmatpush2.msra.mxu0 0.0
    %166 = vmatprep.subr.mxu0 0.0
    %167 = vmatpush2.msra.mxu0 0.0
    %168 = vmatprep.subr.mxu0 0.0
    %169 = vmatpush2.msra.mxu0 0.0
    %170 = vmatprep.subr.mxu0 0.0
    %171 = vmatpush2.msra.mxu0 0.0
    %172 = vmatprep.subr.mxu0 0.0
    %173 = vmatpush2.msra.mxu0 0.0
    %174 = vmatprep.subr.mxu0 0.0
    %175 = vmatpush2.msra.mxu0 0.0
    %176 = vmatprep.subr.mxu0 0.0
    %177 = vmatpush2.msra.mxu0 0.0
    %178 = vmatprep.subr.mxu0 0.0
    %179 = vmatpush2.msra.mxu0 0.0
    %180 = vmatprep.subr.mxu0 0.0
    %181 = vmatpush2.msra.mxu0 0.0
    %182 = vmatprep.mubr.f32.mxu0 0.0
    %183 = vmatmul.mubr.f32.gmra.mxu0 %v116
    %v184 = vpop.f32.mrf.mxu0
    %v185 = vadd.f32 %v113, %v184
    %v186 = vpop.f32.mrf.mxu0
    %187 = vdwg.mxu0
    %188 = vst [vmem:[#allocation2] sm:$0xff] %v185
    // Predicated region
    $region18: #{tpu_custom_call.1} parent=1 // pred_check
      _
    $region19: #{tpu_custom_call.1} parent=1 // pred_check_branch
      %190 = sbr.rel (0) target = $region21
    $region20: #{tpu_custom_call.1} parent=1 // pred_region
      %s192 = ssub.s32 128, 128
      %193 = vsyncadd [#allocation3], %s192
      %s195 = sshll.u32 [#allocation2], 4
      %s196 = int_to_ptr.vmem [resolvable:$true] %s195
      %198 = dma.vmem_to_hbm [thread:$0]  %s196, 128, %s4, [#allocation3]
    $region21: #{tpu_custom_call.1} parent=1 // pred_fallthru
      _
    // Predicated region
    $region22: #{tpu_custom_call.1} parent=1 // pred_check
      _
    $region23: #{tpu_custom_call.1} parent=1 // pred_check_branch
      %200 = sbr.rel (0) target = $region25
    $region24: #{tpu_custom_call.1} parent=1 // pred_region
      %201 = dma.done [#allocation3], 128
    $region25: #{tpu_custom_call.1} parent=1 // pred_fallthru
      _
    %202 = vsyncpa [#allocation3], 1

</llo_original>
